<compile_context>
chip_gen: v6e
topology: v6e:2x2x1
jax: 0.10.0
libtpu: 0.0.40
codegen_flags: <defaults>
</compile_context>

<pallas_src>
import jax
import jax.numpy as jnp
from jax.experimental import pallas as pl
from jax.experimental.pallas import tpu as pltpu


def _round_up(x, m):
    return ((x + m - 1) // m) * m


def _cdiv(a, b):
    return (a + b - 1) // b


# -----------------------------------------------------------------------------
# Kernel body: one (tm, K) activation tile -> (tm, Op) output tile.
# Weights / biases are grid-invariant and stay resident in VMEM.
# -----------------------------------------------------------------------------
def shared_mlp_kernel(x_ref, w1_ref, b1_ref, w2_ref, b2_ref, o_ref):
    # x_ref : (tm, K)           activation tile (streams over the grid)
    # w1_ref: (K, Hp)  b1_ref: (1, Hp) f32     grid-invariant, VMEM-resident
    # w2_ref: (Hp, Op) b2_ref: (1, Op) f32
    # o_ref : (tm, Op)
    h = jnp.dot(x_ref[...], w1_ref[...], preferred_element_type=jnp.float32)
    h = jnp.maximum(h + b1_ref[...], 0.0)                   # Linear -> ReLU
    y = jnp.dot(h.astype(w2_ref.dtype), w2_ref[...],
                preferred_element_type=jnp.float32)
    o_ref[...] = (y + b2_ref[...]).astype(o_ref.dtype)


# -----------------------------------------------------------------------------
# One-time parameter prep (outside the per-step hot path).
# -----------------------------------------------------------------------------
def prepare_params(w1, b1, w2, b2, compute_dtype=None):
    """torch nn.Linear layout in: w1 (hidden, in), b1 (hidden,),
    w2 (out, hidden), b2 (out,).

    Returns (in, out)-layout weights.  The input (contraction) dim is left
    UNPADDED (a block dim equal to the full array dim is legal) so the caller
    never pays an extra HBM pass just to lane-pad x; hidden / output dims are
    zero-padded to multiples of 128 so the intermediate and the output store
    are lane-dense.  Biases are pre-cast to f32 (the accumulator dtype).
    On v5e/v6e pass compute_dtype=jnp.bfloat16 for the bandwidth + MXU win.
    """
    hidden_dim, input_dim = w1.shape
    output_dim = w2.shape[0]
    Hp = _round_up(hidden_dim, 128)
    Op = _round_up(output_dim, 128)
    dt = jnp.dtype(compute_dtype) if compute_dtype is not None else jnp.dtype(w1.dtype)

    w1_t = jnp.zeros((input_dim, Hp), dt).at[:, :hidden_dim].set(w1.T.astype(dt))
    b1_p = jnp.zeros((1, Hp), jnp.float32).at[0, :hidden_dim].set(
        b1.astype(jnp.float32))
    w2_t = jnp.zeros((Hp, Op), dt).at[:hidden_dim, :output_dim].set(w2.T.astype(dt))
    b2_p = jnp.zeros((1, Op), jnp.float32).at[0, :output_dim].set(
        b2.astype(jnp.float32))
    return (w1_t, b1_p, w2_t, b2_p), (input_dim, hidden_dim, output_dim)


def _vmem_capacity_bytes():
    try:
        return int(pltpu.get_tpu_info().vmem_capacity_bytes)
    except Exception:
        # Conservative default = v7x per-TensorCore VMEM.
        return 64 * 1024 * 1024


def _choose_tm(n_rows, K, Hp, Op, x_bytes, w_bytes, out_bytes, budget_bytes,
               max_tm=2048):
    """Largest row tile that fits a VMEM budget, rounded to the dtype's
    sublane multiple, capped to keep >=2 grid steps (v7x megacore) and
    re-balanced to minimise row-padding waste."""
    n_rows = max(n_rows, 1)
    sub = max(8, 32 // max(x_bytes, 1))          # f32 -> 8, bf16 -> 16, int8 -> 32

    # Weights single-buffered (constant index_map + Buffered(1)); biases f32.
    weight_bytes = (K * Hp + Hp * Op) * w_bytes + (Hp + Op) * 4
    avail = max(budget_bytes - weight_bytes, 1 << 20)
    # Per row: double-buffered x / out tiles + f32 h / y intermediates.
    per_row = 2 * K * x_bytes + 2 * Op * out_bytes + (Hp + Op) * 4

    tm = int(max(sub, min(avail // per_row, max_tm)))
    tm = (tm // sub) * sub
    # Never tile wider than the (row-padded) problem itself.
    tm = min(tm, _round_up(n_rows, sub))
    # Keep at least 2 grid steps so v7x's two TensorCores both get work under
    # dimension_semantics=("parallel",).  Harmless on 1-TC v5e/v6e.
    tm = max(sub, min(tm, _round_up(_cdiv(n_rows, 2), sub)))
    # Re-balance toward ceil(N / steps): avoids large zero-row waste for
    # awkward N (e.g. N=1100 with tm=1024 would waste ~45% of the work).
    steps = _cdiv(n_rows, tm)
    tm = max(sub, _round_up(_cdiv(n_rows, steps), sub))
    return tm


def shared_mlp_prepared(x, prepared, dims, *, tm=None):
    """x: (N, input_dim). `prepared`/`dims` come from prepare_params()."""
    w1_t, b1_p, w2_t, b2_p = prepared
    input_dim, hidden_dim, output_dim = dims
    N, K = x.shape
    assert K == input_dim, (K, input_dim)
    Hp = w1_t.shape[1]
    Op = w2_t.shape[1]

    compute_dt = w1_t.dtype          # x is streamed through the MXU in this dtype
    out_dt = x.dtype                 # output keeps the caller's dtype

    x_bytes = jnp.dtype(compute_dt).itemsize
    w_bytes = jnp.dtype(w1_t.dtype).itemsize
    out_bytes = jnp.dtype(out_dt).itemsize

    # Generation-aware VMEM limit/budget: ~96 MiB on v5e/v6e (128 MiB VMEM),
    # ~48 MiB on v7x (64 MiB / TensorCore), with headroom for compiler scratch.
    vmem_cap = _vmem_capacity_bytes()
    vmem_limit = min(int(vmem_cap * 0.75), 100 * 1024 * 1024)
    budget = int(vmem_limit * 0.65)

    if tm is None:
        tm = _choose_tm(N, K, Hp, Op, x_bytes, w_bytes, out_bytes, budget)

    Np = _round_up(N, tm)

    # Touch x only when something actually has to change (row pad and/or cast):
    # the kernel is HBM-bandwidth bound for small feature dims and an extra
    # pad pass over x can cost as much as the kernel itself.
    if Np != N:
        x_in = jnp.zeros((Np, K), compute_dt).at[:N, :].set(x.astype(compute_dt))
    elif x.dtype != compute_dt:
        x_in = x.astype(compute_dt)
    else:
        x_in = x

    grid = (Np // tm,)

    flops = 2 * Np * (K * Hp + Hp * Op)
    bytes_accessed = (Np * K * x_bytes + Np * Op * out_bytes
                      + (K * Hp + Hp * Op) * w_bytes + (Hp + Op) * 4)

    def param_spec(shape, single_buffer):
        # Grid-invariant parameters: constant index_map elides the re-DMA;
        # Buffered(1) additionally drops the second (useless) VMEM buffer.
        if single_buffer and hasattr(pl, "Buffered"):
            return pl.BlockSpec(shape, lambda i: (0,) * len(shape),
                                pipeline_mode=pl.Buffered(1))
        return pl.BlockSpec(shape, lambda i: (0,) * len(shape))

    def run(single_buffer_weights):
        return pl.pallas_call(
            shared_mlp_kernel,
            out_shape=jax.ShapeDtypeStruct((Np, Op), out_dt),
            grid_spec=pltpu.PrefetchScalarGridSpec(
                num_scalar_prefetch=0,
                grid=grid,
                in_specs=[
                    pl.BlockSpec((tm, K), lambda i: (i, 0)),        # x tile (streams)
                    param_spec((K, Hp), single_buffer_weights),     # W1 (resident)
                    param_spec((1, Hp), single_buffer_weights),     # b1 (f32)
                    param_spec((Hp, Op), single_buffer_weights),    # W2 (resident)
                    param_spec((1, Op), single_buffer_weights),     # b2 (f32)
                ],
                out_specs=pl.BlockSpec((tm, Op), lambda i: (i, 0)),
            ),
            compiler_params=pltpu.CompilerParams(
                dimension_semantics=("parallel",),   # shard rows across v7x TCs
                vmem_limit_bytes=vmem_limit,
            ),
            cost_estimate=pl.CostEstimate(
                flops=flops, transcendentals=0, bytes_accessed=bytes_accessed),
        )(x_in, w1_t, b1_p, w2_t, b2_p)

    try:
        out_p = run(True)          # single-buffered grid-invariant weights
    except Exception:
        out_p = run(False)         # fallback: default double-buffering

    # Strip row / lane padding only when there is any.
    if Np != N or Op != output_dim:
        out_p = out_p[:N, :output_dim]
    return out_p


def shared_mlp(x, w1, b1, w2, b2, *, tm=None, compute_dtype=None):
    """Convenience wrapper (prep + call).  For repeated calls with the same
    parameters, call prepare_params() once and reuse shared_mlp_prepared()."""
    prepared, dims = prepare_params(w1, b1, w2, b2, compute_dtype)
    return shared_mlp_prepared(x, prepared, dims, tm=tm)


def shared_mlp_ref(x, w1, b1, w2, b2):
    h = jnp.maximum(x @ w1.T + b1, 0.0)
    return h @ w2.T + b2


if __name__ == "__main__":
    # Small but deliberately awkward shapes: N is not a multiple of the tile
    # and all feature dims are below 128, exercising remainder handling, the
    # unpadded-K path and the lane-dense Hp/Op padding path.
    N, input_dim, hidden_dim, output_dim = 50, 12, 40, 24

    key = jax.random.PRNGKey(0)
    kx, kw1, kb1, kw2, kb2 = jax.random.split(key, 5)

    x = jax.random.normal(kx, (N, input_dim), dtype=jnp.float32)
    # torch nn.Linear layout: weight (out_features, in_features), bias (out,)
    w1 = jax.random.normal(kw1, (hidden_dim, input_dim), dtype=jnp.float32) * 0.1
    b1 = jax.random.normal(kb1, (hidden_dim,), dtype=jnp.float32) * 0.1
    w2 = jax.random.normal(kw2, (output_dim, hidden_dim), dtype=jnp.float32) * 0.1
    b2 = jax.random.normal(kb2, (output_dim,), dtype=jnp.float32) * 0.1

    ref = shared_mlp_ref(x, w1, b1, w2, b2)

    # f32 compute path: bit-tight against the reference.
    out = jax.block_until_ready(shared_mlp(x, w1, b1, w2, b2))
    assert out.shape == (N, output_dim)
    assert jnp.allclose(out, ref, atol=1e-5, rtol=1e-5)

    # bf16 compute path (recommended on v5e/v6e): x is cast in the wrapper,
    # accumulation stays f32, so tolerance is loose but comfortable.
    out_bf16 = jax.block_until_ready(
        shared_mlp(x, w1, b1, w2, b2, compute_dtype=jnp.bfloat16))
    assert out_bf16.shape == (N, output_dim)
    assert jnp.allclose(out_bf16, ref, atol=1e-1, rtol=1e-1)

    print("KERNEL_OK")
</pallas_src>

<mosaic_0001>
module attributes {stable_mosaic.version = 11 : i64} {
  func.func @shared_mlp_kernel(%arg0: i32, %arg1: memref<32x12xf32, #tpu.memory_space<vmem>>, %arg2: memref<12x128xf32, #tpu.memory_space<vmem>>, %arg3: memref<1x128xf32, #tpu.memory_space<vmem>>, %arg4: memref<128x128xf32, #tpu.memory_space<vmem>>, %arg5: memref<1x128xf32, #tpu.memory_space<vmem>>, %arg6: memref<32x128xf32, #tpu.memory_space<vmem>>) attributes {dimension_semantics = [#tpu.dimension_semantics<parallel>], iteration_bounds = array<i64: 2>, scalar_prefetch = 0 : i64, scratch_operands = 0 : i64, tpu.core_type = #tpu.core_type<tc>, window_params = [{transform_indices = @transform_0, window_bounds = array<i64: 32, 12>}, {pipeline_mode = #tpu.pipeline_mode<synchronous>, transform_indices = @transform_1, window_bounds = array<i64: 12, 128>}, {pipeline_mode = #tpu.pipeline_mode<synchronous>, transform_indices = @transform_2, window_bounds = array<i64: 1, 128>}, {pipeline_mode = #tpu.pipeline_mode<synchronous>, transform_indices = @transform_3, window_bounds = array<i64: 128, 128>}, {pipeline_mode = #tpu.pipeline_mode<synchronous>, transform_indices = @transform_4, window_bounds = array<i64: 1, 128>}, {transform_indices = @transform_5, window_bounds = array<i64: 32, 128>}]} {
    %c0 = arith.constant 0 : index
    %c0_0 = arith.constant 0 : index
    %0 = vector.load %arg1[%c0, %c0_0] : memref<32x12xf32, #tpu.memory_space<vmem>>, vector<32x12xf32>
    %c0_1 = arith.constant 0 : index
    %c0_2 = arith.constant 0 : index
    %1 = vector.load %arg2[%c0_1, %c0_2] : memref<12x128xf32, #tpu.memory_space<vmem>>, vector<12x128xf32>
    %cst = arith.constant dense<0.000000e+00> : vector<32x128xf32>
    %2 = tpu.matmul %0, %1, %cst {dimension_numbers = #tpu.dot_dimension_numbers<[1], [0], [0], [1], [0, 0, 1, 1], [], []>} : vector<32x12xf32>, vector<12x128xf32>, vector<32x128xf32> -> vector<32x128xf32>
    %c0_3 = arith.constant 0 : index
    %c0_4 = arith.constant 0 : index
    %3 = vector.load %arg3[%c0_3, %c0_4] : memref<1x128xf32, #tpu.memory_space<vmem>>, vector<1x128xf32>
    %4 = vector.broadcast %3 : vector<1x128xf32> to vector<32x128xf32>
    %5 = arith.addf %2, %4 : vector<32x128xf32>
    %cst_5 = arith.constant 0.000000e+00 : f32
    %6 = vector.broadcast %cst_5 : f32 to vector<32x128xf32>
    %7 = arith.maximumf %5, %6 : vector<32x128xf32>
    %c0_6 = arith.constant 0 : index
    %c0_7 = arith.constant 0 : index
    %8 = vector.load %arg4[%c0_6, %c0_7] : memref<128x128xf32, #tpu.memory_space<vmem>>, vector<128x128xf32>
    %cst_8 = arith.constant dense<0.000000e+00> : vector<32x128xf32>
    %9 = tpu.matmul %7, %8, %cst_8 {dimension_numbers = #tpu.dot_dimension_numbers<[1], [0], [0], [1], [0, 0, 1, 1], [], []>} : vector<32x128xf32>, vector<128x128xf32>, vector<32x128xf32> -> vector<32x128xf32>
    %c0_9 = arith.constant 0 : index
    %c0_10 = arith.constant 0 : index
    %10 = vector.load %arg5[%c0_9, %c0_10] : memref<1x128xf32, #tpu.memory_space<vmem>>, vector<1x128xf32>
    %11 = vector.broadcast %10 : vector<1x128xf32> to vector<32x128xf32>
    %12 = arith.addf %9, %11 : vector<32x128xf32>
    %c0_11 = arith.constant 0 : index
    %c0_12 = arith.constant 0 : index
    %13 = vector.load %arg6[%c0_11, %c0_12] : memref<32x128xf32, #tpu.memory_space<vmem>>, vector<32x128xf32>
    tpu.vector_store %arg6[%c0_11, %c0_12], %12 {strides = array<i32>} : memref<32x128xf32, #tpu.memory_space<vmem>>, vector<32x128xf32>,
    return
  }
  func.func @transform_0(%arg0: i32) -> (i32, i32) {
    %c0_i32 = arith.constant 0 : i32
    %c0_i32_0 = arith.constant 0 : i32
    return %arg0, %c0_i32 : i32, i32
  }
  func.func @transform_1(%arg0: i32) -> (i32, i32) {
    %c0_i32 = arith.constant 0 : i32
    %c0_i32_0 = arith.constant 0 : i32
    %c0_i32_1 = arith.constant 0 : i32
    return %c0_i32, %c0_i32_0 : i32, i32
  }
  func.func @transform_2(%arg0: i32) -> (i32, i32) {
    %c0_i32 = arith.constant 0 : i32
    %c0_i32_0 = arith.constant 0 : i32
    %c0_i32_1 = arith.constant 0 : i32
    return %c0_i32, %c0_i32_0 : i32, i32
  }
  func.func @transform_3(%arg0: i32) -> (i32, i32) {
    %c0_i32 = arith.constant 0 : i32
    %c0_i32_0 = arith.constant 0 : i32
    %c0_i32_1 = arith.constant 0 : i32
    return %c0_i32, %c0_i32_0 : i32, i32
  }
  func.func @transform_4(%arg0: i32) -> (i32, i32) {
    %c0_i32 = arith.constant 0 : i32
    %c0_i32_0 = arith.constant 0 : i32
    %c0_i32_1 = arith.constant 0 : i32
    return %c0_i32, %c0_i32_0 : i32, i32
  }
  func.func @transform_5(%arg0: i32) -> (i32, i32) {
    %c0_i32 = arith.constant 0 : i32
    %c0_i32_0 = arith.constant 0 : i32
    return %arg0, %c0_i32 : i32, i32
  }
}

module attributes {stable_mosaic.version = 11 : i64} {
  func.func @shared_mlp_kernel(%arg0: i32, %arg1: memref<32x12xf32, #tpu.memory_space<vmem>>, %arg2: memref<12x128xf32, #tpu.memory_space<vmem>>, %arg3: memref<1x128xf32, #tpu.memory_space<vmem>>, %arg4: memref<128x128xf32, #tpu.memory_space<vmem>>, %arg5: memref<1x128xf32, #tpu.memory_space<vmem>>, %arg6: memref<32x128xf32, #tpu.memory_space<vmem>>) attributes {dimension_semantics = [#tpu.dimension_semantics<parallel>], iteration_bounds = array<i64: 2>, scalar_prefetch = 0 : i64, scratch_operands = 0 : i64, tpu.core_type = #tpu.core_type<tc>, window_params = [{transform_indices = @transform_0, window_bounds = array<i64: 32, 12>}, {pipeline_mode = #tpu.pipeline_mode<synchronous>, transform_indices = @transform_1, window_bounds = array<i64: 12, 128>}, {pipeline_mode = #tpu.pipeline_mode<synchronous>, transform_indices = @transform_2, window_bounds = array<i64: 1, 128>}, {pipeline_mode = #tpu.pipeline_mode<synchronous>, transform_indices = @transform_3, window_bounds = array<i64: 128, 128>}, {pipeline_mode = #tpu.pipeline_mode<synchronous>, transform_indices = @transform_4, window_bounds = array<i64: 1, 128>}, {transform_indices = @transform_5, window_bounds = array<i64: 32, 128>}]} {
    %c0 = arith.constant 0 : index
    %c0_0 = arith.constant 0 : index
    %0 = vector.load %arg1[%c0, %c0_0] : memref<32x12xf32, #tpu.memory_space<vmem>>, vector<32x12xf32>
    %c0_1 = arith.constant 0 : index
    %c0_2 = arith.constant 0 : index
    %1 = vector.load %arg2[%c0_1, %c0_2] : memref<12x128xf32, #tpu.memory_space<vmem>>, vector<12x128xf32>
    %cst = arith.constant dense<0.000000e+00> : vector<32x128xf32>
    %2 = tpu.matmul %0, %1, %cst {dimension_numbers = #tpu.dot_dimension_numbers<[1], [0], [0], [1], [0, 0, 1, 1], [], []>} : vector<32x12xf32>, vector<12x128xf32>, vector<32x128xf32> -> vector<32x128xf32>
    %c0_3 = arith.constant 0 : index
    %c0_4 = arith.constant 0 : index
    %3 = vector.load %arg3[%c0_3, %c0_4] : memref<1x128xf32, #tpu.memory_space<vmem>>, vector<1x128xf32>
    %4 = vector.broadcast %3 : vector<1x128xf32> to vector<32x128xf32>
    %5 = arith.addf %2, %4 : vector<32x128xf32>
    %cst_5 = arith.constant 0.000000e+00 : f32
    %6 = vector.broadcast %cst_5 : f32 to vector<32x128xf32>
    %7 = arith.maximumf %5, %6 : vector<32x128xf32>
    %c0_6 = arith.constant 0 : index
    %c0_7 = arith.constant 0 : index
    %8 = vector.load %arg4[%c0_6, %c0_7] : memref<128x128xf32, #tpu.memory_space<vmem>>, vector<128x128xf32>
    %cst_8 = arith.constant dense<0.000000e+00> : vector<32x128xf32>
    %9 = tpu.matmul %7, %8, %cst_8 {dimension_numbers = #tpu.dot_dimension_numbers<[1], [0], [0], [1], [0, 0, 1, 1], [], []>} : vector<32x128xf32>, vector<128x128xf32>, vector<32x128xf32> -> vector<32x128xf32>
    %c0_9 = arith.constant 0 : index
    %c0_10 = arith.constant 0 : index
    %10 = vector.load %arg5[%c0_9, %c0_10] : memref<1x128xf32, #tpu.memory_space<vmem>>, vector<1x128xf32>
    %11 = vector.broadcast %10 : vector<1x128xf32> to vector<32x128xf32>
    %12 = arith.addf %9, %11 : vector<32x128xf32>
    %c0_11 = arith.constant 0 : index
    %c0_12 = arith.constant 0 : index
    %13 = vector.load %arg6[%c0_11, %c0_12] : memref<32x128xf32, #tpu.memory_space<vmem>>, vector<32x128xf32>
    tpu.vector_store %arg6[%c0_11, %c0_12], %12 {strides = array<i32>} : memref<32x128xf32, #tpu.memory_space<vmem>>, vector<32x128xf32>,
    return
  }
  func.func @transform_0(%arg0: i32) -> (i32, i32) {
    %c0_i32 = arith.constant 0 : i32
    %c0_i32_0 = arith.constant 0 : i32
    return %arg0, %c0_i32 : i32, i32
  }
  func.func @transform_1(%arg0: i32) -> (i32, i32) {
    %c0_i32 = arith.constant 0 : i32
    %c0_i32_0 = arith.constant 0 : i32
    %c0_i32_1 = arith.constant 0 : i32
    return %c0_i32, %c0_i32_0 : i32, i32
  }
  func.func @transform_2(%arg0: i32) -> (i32, i32) {
    %c0_i32 = arith.constant 0 : i32
    %c0_i32_0 = arith.constant 0 : i32
    %c0_i32_1 = arith.constant 0 : i32
    return %c0_i32, %c0_i32_0 : i32, i32
  }
  func.func @transform_3(%arg0: i32) -> (i32, i32) {
    %c0_i32 = arith.constant 0 : i32
    %c0_i32_0 = arith.constant 0 : i32
    %c0_i32_1 = arith.constant 0 : i32
    return %c0_i32, %c0_i32_0 : i32, i32
  }
  func.func @transform_4(%arg0: i32) -> (i32, i32) {
    %c0_i32 = arith.constant 0 : i32
    %c0_i32_0 = arith.constant 0 : i32
    %c0_i32_1 = arith.constant 0 : i32
    return %c0_i32, %c0_i32_0 : i32, i32
  }
  func.func @transform_5(%arg0: i32) -> (i32, i32) {
    %c0_i32 = arith.constant 0 : i32
    %c0_i32_0 = arith.constant 0 : i32
    return %arg0, %c0_i32 : i32, i32
  }
}

</mosaic_0001>

<llo_original>
// kernel: tpu_custom_call.1
$region0: #{tpu_custom_call.1}
  #allocation0 [shape = 'u32[]', space=smem, size = 0x4, offset = 0x4, fixed_abs, tag = 'smem constant byte address 0x4 - core index']
  #allocation1 [shape = 'u32[144,128]{1,0:T(1,128)}', space=vmem, size = 0x12000, scoped, tag = 'internal scratch']
  %s0 = inlined_call_operand.vmem [shape: f32[64,12], index: 0, kind: input, shape index: {}]
  %s1 = inlined_call_operand.vmem [shape: f32[12,128], index: 1, kind: input, shape index: {}]
  %s2 = inlined_call_operand.vmem [shape: f32[1,128], index: 2, kind: input, shape index: {}]
  %s3 = inlined_call_operand.hbm [shape: f32[128,128], index: 3, kind: input, shape index: {}]
  %s4 = inlined_call_operand.vmem [shape: f32[1,128], index: 4, kind: input, shape index: {}]
  %s5 = inlined_call_operand.hbm [shape: f32[64,128], index: 5, kind: output, shape index: {}]
  %s6 = sld [smem:[#allocation0]]
  $region57: #{tpu_custom_call.1} parent=0
    _
  %s8 = ssub.s32 1, %s6
  %s9 = scalar_select 0, %s8, %s6
  $region1: #{tpu_custom_call.1} parent=0
    #allocation2 [shape = 'u8[65536]{0}', space=vmem, size = 0x10000, scoped, tag = 'input window, operand 3, single buffered']
    #allocation3 [shape = 's32[2]{0}', space=sflag, size = 0x8, scoped, tag = 'scoped memory for tpu_custom_call.1']
    #allocation4 [shape = 's32[2]{0}', space=sflag, size = 0x8, scoped, tag = 'scoped memory for tpu_custom_call.1']
    #allocation5 [shape = 'u8[32768]{0}', space=vmem, size = 0x8000, scoped, tag = 'output window, operand 0']
    %10 = vsyncpa [#allocation3], 0
    %11 = vsyncpa [#allocation4], 0
    %s12 = scalar_lea.sflag [#allocation4], 1
    %13 = vsyncpa %s12, 0
    loop: start=0, step=1, limit=4
    $region2: #{tpu_custom_call.1} parent=1 // loop_pre_header
      _
    $region3: #{tpu_custom_call.1} parent=1 // loop_header
      %s15 = sphi 0, %s19
      %p16 = scmp.ge.s32.totalorder %s15, 4
      %s25 = sphi 0, %s27
      %s28 = sphi 0, %s25
      %s29 = sphi 0, %s28
      %s45 = sphi 0, %s29
      %s49 = sphi 0, %s49
      %s51 = sphi 0, %s49
      %s52 = sphi 0, %s51
      %s66 = sphi 0, %s52
      %s70 = sphi 0, %s70
      %s72 = sphi 0, %s70
      %s73 = sphi 0, %s72
      %s87 = sphi 0, %s73
      %s91 = sphi 0, %s91
      %s93 = sphi 0, %s91
      %s94 = sphi 0, %s93
      %s108 = sphi 0, %s94
      %s112 = sphi 0, %s112
      %s114 = sphi 0, %s112
      %s115 = sphi 0, %s114
      %s129 = sphi 0, %s115
      %s135 = sphi 0, %s137
      %s138 = sphi 0, %s135
      %s139 = sphi 0, %s138
      %s155 = sphi 0, %s139
    $region4: #{tpu_custom_call.1} parent=1 // loop_header_branch
      %18 = sbr.rel (%p16) target = $region8
    $region5: #{tpu_custom_call.1} parent=1 // loop_body
      %s20 = ssub.s32 %s15, 1
      %s21 = ssub.s32 %s15, 2
      %s22 = sadd.s32 %s15, 1
      %s23 = ssub.s32 %s15, %s22
      %p24 = scmp.eq.s32.totalorder %s23, 0
      %s26 = sadd.s32 %s25, 1
      %s27 = scalar_select %p24, %s25, %s26
      %p30 = pneg %p24
      %p31 = scmp.eq.s32.totalorder %s15, 1
      %p32 = por %p30, %p31
      %p33 = scmp.ne.s32.totalorder %s25, %s28
      %p34 = scmp.eq.s32.totalorder %s15, 0
      %p35 = por %p33, %p34
      %p36 = scmp.ne.s32.totalorder %s25, %s28
      %p37 = scmp.eq.s32.totalorder %s20, 1
      %p38 = por %p36, %p37
      %p39 = scmp.ne.s32.totalorder %s28, %s29
      %p40 = scmp.eq.s32.totalorder %s20, 0
      %p41 = por %p39, %p40
      %p42 = scmp.ne.s32.totalorder %s28, %s29
      %p43 = scmp.eq.s32.totalorder %s21, 1
      %p44 = por %p42, %p43
      %p46 = scmp.ne.s32.totalorder %s29, %s45
      %p47 = scmp.eq.s32.totalorder %s21, 0
      %p48 = por %p46, %p47
      %s50 = sadd.s32 %s49, 1
      %p53 = scmp.eq.s32.totalorder %s15, 1
      %p54 = scmp.ne.s32.totalorder %s49, %s51
      %p55 = scmp.eq.s32.totalorder %s15, 0
      %p56 = por %p54, %p55
      %p57 = scmp.ne.s32.totalorder %s49, %s51
      %p58 = scmp.eq.s32.totalorder %s20, 1
      %p59 = por %p57, %p58
      %p60 = scmp.ne.s32.totalorder %s51, %s52
      %p61 = scmp.eq.s32.totalorder %s20, 0
      %p62 = por %p60, %p61
      %p63 = scmp.ne.s32.totalorder %s51, %s52
      %p64 = scmp.eq.s32.totalorder %s21, 1
      %p65 = por %p63, %p64
      %p67 = scmp.ne.s32.totalorder %s52, %s66
      %p68 = scmp.eq.s32.totalorder %s21, 0
      %p69 = por %p67, %p68
      %s71 = sadd.s32 %s70, 1
      %p74 = scmp.eq.s32.totalorder %s15, 1
      %p75 = scmp.ne.s32.totalorder %s70, %s72
      %p76 = scmp.eq.s32.totalorder %s15, 0
      %p77 = por %p75, %p76
      %p78 = scmp.ne.s32.totalorder %s70, %s72
      %p79 = scmp.eq.s32.totalorder %s20, 1
      %p80 = por %p78, %p79
      %p81 = scmp.ne.s32.totalorder %s72, %s73
      %p82 = scmp.eq.s32.totalorder %s20, 0
      %p83 = por %p81, %p82
      %p84 = scmp.ne.s32.totalorder %s72, %s73
      %p85 = scmp.eq.s32.totalorder %s21, 1
      %p86 = por %p84, %p85
      %p88 = scmp.ne.s32.totalorder %s73, %s87
      %p89 = scmp.eq.s32.totalorder %s21, 0
      %p90 = por %p88, %p89
      %s92 = sadd.s32 %s91, 1
      %p95 = scmp.eq.s32.totalorder %s15, 1
      %p96 = scmp.ne.s32.totalorder %s91, %s93
      %p97 = scmp.eq.s32.totalorder %s15, 0
      %p98 = por %p96, %p97
      %p99 = scmp.ne.s32.totalorder %s91, %s93
      %p100 = scmp.eq.s32.totalorder %s20, 1
      %p101 = por %p99, %p100
      %p102 = scmp.ne.s32.totalorder %s93, %s94
      %p103 = scmp.eq.s32.totalorder %s20, 0
      %p104 = por %p102, %p103
      %p105 = scmp.ne.s32.totalorder %s93, %s94
      %p106 = scmp.eq.s32.totalorder %s21, 1
      %p107 = por %p105, %p106
      %p109 = scmp.ne.s32.totalorder %s94, %s108
      %p110 = scmp.eq.s32.totalorder %s21, 0
      %p111 = por %p109, %p110
      %s113 = sadd.s32 %s112, 1
      %p116 = scmp.eq.s32.totalorder %s15, 1
      %p117 = scmp.ne.s32.totalorder %s112, %s114
      %p118 = scmp.eq.s32.totalorder %s15, 0
      %p119 = por %p117, %p118
      %p120 = scmp.ne.s32.totalorder %s112, %s114
      %p121 = scmp.eq.s32.totalorder %s20, 1
      %p122 = por %p120, %p121
      %p123 = scmp.ne.s32.totalorder %s114, %s115
      %p124 = scmp.eq.s32.totalorder %s20, 0
      %p125 = por %p123, %p124
      %p126 = scmp.ne.s32.totalorder %s114, %s115
      %p127 = scmp.eq.s32.totalorder %s21, 1
      %p128 = por %p126, %p127
      %p130 = scmp.ne.s32.totalorder %s115, %s129
      %p131 = scmp.eq.s32.totalorder %s21, 0
      %p132 = por %p130, %p131
      %s133 = ssub.s32 %s15, %s22
      %p134 = scmp.eq.s32.totalorder %s133, 0
      %s136 = sadd.s32 %s135, 1
      %s137 = scalar_select %p134, %s135, %s136
      %p140 = pneg %p134
      %p141 = scmp.eq.s32.totalorder %s15, 1
      %p142 = por %p140, %p141
      %p143 = scmp.ne.s32.totalorder %s135, %s138
      %p144 = scmp.eq.s32.totalorder %s15, 0
      %p145 = por %p143, %p144
      %p146 = scmp.ne.s32.totalorder %s135, %s138
      %p147 = scmp.eq.s32.totalorder %s20, 1
      %p148 = por %p146, %p147
      %p149 = scmp.ne.s32.totalorder %s138, %s139
      %p150 = scmp.eq.s32.totalorder %s20, 0
      %p151 = por %p149, %p150
      %p152 = scmp.ne.s32.totalorder %s138, %s139
      %p153 = scmp.eq.s32.totalorder %s21, 1
      %p154 = por %p152, %p153
      %p156 = scmp.ne.s32.totalorder %s139, %s155
      %p157 = scmp.eq.s32.totalorder %s21, 0
      %p158 = por %p156, %p157
      %p159 = scmp.le.s32.totalorder 1, %s15
      %p160 = scmp.lt.s32.totalorder %s15, 3
      %p161 = pnand %p159, %p160
      %p162 = pneg %p161
      // Predicated region
      $region9: #{tpu_custom_call.1} parent=5 // pred_check
        _
      $region10: #{tpu_custom_call.1} parent=5 // pred_check_branch
        %164 = sbr.rel (%p161) target = $region12
      $region11: #{tpu_custom_call.1} parent=5 // pred_region
        %s165 = ssub.s32 %s15, 1
        // Predicated region
        $region13: #{tpu_custom_call.1} parent=11 // pred_check
          %p166 = pneg %p62
        $region14: #{tpu_custom_call.1} parent=11 // pred_check_branch
          %168 = sbr.rel (%p166) target = $region16
        $region15: #{tpu_custom_call.1} parent=11 // pred_region
          _
        $region16: #{tpu_custom_call.1} parent=11 // pred_fallthru
          _
        // Predicated region
        $region17: #{tpu_custom_call.1} parent=11 // pred_check
          %p169 = pneg %p83
        $region18: #{tpu_custom_call.1} parent=11 // pred_check_branch
          %171 = sbr.rel (%p169) target = $region20
        $region19: #{tpu_custom_call.1} parent=11 // pred_region
          _
        $region20: #{tpu_custom_call.1} parent=11 // pred_fallthru
          _
        // Predicated region
        $region21: #{tpu_custom_call.1} parent=11 // pred_check
          %p172 = pneg %p104
        $region22: #{tpu_custom_call.1} parent=11 // pred_check_branch
          %174 = sbr.rel (%p172) target = $region24
        $region23: #{tpu_custom_call.1} parent=11 // pred_region
          %s176 = ssub.s32 2048, 2048
          %177 = vsyncadd [#allocation3], %s176
          %s178 = sshll.u32 [#allocation2], 4
          %s179 = int_to_ptr.vmem [resolvable:$true] %s178
          %184 = dma.hbm_to_vmem [thread:$0]  %s3, 2048, %s179, [#allocation3], 128, 128, 8
        $region24: #{tpu_custom_call.1} parent=11 // pred_fallthru
          _
        // Predicated region
        $region25: #{tpu_custom_call.1} parent=11 // pred_check
          %p185 = pneg %p125
        $region26: #{tpu_custom_call.1} parent=11 // pred_check_branch
          %187 = sbr.rel (%p185) target = $region28
        $region27: #{tpu_custom_call.1} parent=11 // pred_region
          _
        $region28: #{tpu_custom_call.1} parent=11 // pred_fallthru
          _
      $region12: #{tpu_custom_call.1} parent=5 // pred_fallthru
        _
      %p188 = scmp.lt.s32.totalorder %s15, 2
      // Predicated region
      $region29: #{tpu_custom_call.1} parent=5 // pred_check
        %p189 = pneg %p188
      $region30: #{tpu_custom_call.1} parent=5 // pred_check_branch
        %191 = sbr.rel (%p189) target = $region32
      $region31: #{tpu_custom_call.1} parent=5 // pred_region
        // Predicated region
        $region33: #{tpu_custom_call.1} parent=31 // pred_check
          %p192 = pneg %p35
        $region34: #{tpu_custom_call.1} parent=31 // pred_check_branch
          %194 = sbr.rel (%p192) target = $region36
        $region35: #{tpu_custom_call.1} parent=31 // pred_region
          %s195 = smul.u32 4, %s15
          %p196 = scmp.lt.s32.totalorder %s195, 7
          %s197 = scalar_select %p196, %s195, 7
          %s198 = smul.addr %s197, 8
          %s199 = scalar_lea.vmem %s0, %s198
          %s200 = smul.u32 4, %s15
        $region36: #{tpu_custom_call.1} parent=31 // pred_fallthru
          _
      $region32: #{tpu_custom_call.1} parent=5 // pred_fallthru
        _
      %p201 = scmp.le.s32.totalorder 1, %s15
      %p202 = scmp.lt.s32.totalorder %s15, 3
      %p203 = pnand %p201, %p202
      %p204 = pneg %p203
      // Predicated region
      $region37: #{tpu_custom_call.1} parent=5 // pred_check
        _
      $region38: #{tpu_custom_call.1} parent=5 // pred_check_branch
        %206 = sbr.rel (%p203) target = $region40
      $region39: #{tpu_custom_call.1} parent=5 // pred_region
        %s207 = ssub.s32 %s15, 1
        // Predicated region
        $region41: #{tpu_custom_call.1} parent=39 // pred_check
          %p208 = pneg %p104
        $region42: #{tpu_custom_call.1} parent=39 // pred_check_branch
          %210 = sbr.rel (%p208) target = $region44
        $region43: #{tpu_custom_call.1} parent=39 // pred_region
          %211 = dma.done [#allocation3], 2048
        $region44: #{tpu_custom_call.1} parent=39 // pred_fallthru
          _
        %s212 = smul.u32 4, %s20
        %p213 = scmp.lt.s32.totalorder %s212, 7
        %s214 = scalar_select %p213, %s212, 7
        %s215 = smul.addr %s214, 8
        %s216 = scalar_lea.vmem %s0, %s215
        %p217 = pneg %p41
        %p218 = pneg %p38
        %p219 = pneg %p62
        %p220 = pneg %p59
        %p221 = pneg %p83
        %p222 = pneg %p80
        %p223 = pneg %p104
        %p224 = pneg %p101
        %p225 = pneg %p125
        %p226 = pneg %p122
        %p227 = pneg %p151
        %p228 = pneg %p148
        %s229 = sand.u32 %s138, 1
        %s230 = scalar_lea.sflag [#allocation4], %s229
        %s231 = sand.u32 %s138, 1
        %s232 = smul.addr %s231, 32
        %s233 = scalar_lea.vmem [#allocation5], %s232
        %s234 = smul.u32 4, %s20
        %p235 = scmp.lt.s32.totalorder %s234, 7
        %s236 = scalar_select %p235, %s234, 7
        %s237 = smul.addr %s236, 8
        %s238 = scalar_lea.vmem %s0, %s237
        %s239 = smul.u32 4, %s20
        %s240 = smul.u32 4, %s20
        %v241 = vld [vmem:[%s238] sm:$0xff]
        %v242 = vld [vmem:[%s238 + $0x8] sm:$0xff]
        %v243 = vld [vmem:[%s238 + $0x10] sm:$0xff]
        %v244 = vld [vmem:[%s238 + $0x18] sm:$0xff]
        %v245 = vld [vmem:[%s1] sm:$0xff]
        %v246 = vld [vmem:[%s1 + $0x8] sm:$0xf]
        %v247 = vld [vmem:[%s2] sm:$0x1]
        %v249 = vlaneseq
        %v250 = vshrl.u32 %v249, 7
        %v251 = vsub.s32 0, %v250
        %v252 = vrot.slane %v247, %v251
        %vm254 = vcmask 97280
        %v256 = vsel %vm254, %v241, 0
        %v259 = vsel %vm254, %v242, 0
        %v262 = vsel %vm254, %v243, 0
        %v265 = vsel %vm254, %v244, 0
        %vm267 = vcmask 1043456
        %v269 = vsel %vm267, %v246, 0
        %271 = vmatprep.subr.mxu0 0.0
        %272 = vmatpush1.msra.mxu0 0.0
        %273 = vmatprep.subr.mxu0 0.0
        %274 = vmatpush1.msra.mxu0 0.0
        %275 = vmatprep.subr.mxu0 0.0
        %276 = vmatpush1.msra.mxu0 0.0
        %277 = vmatprep.subr.mxu0 0.0
        %278 = vmatpush1.msra.mxu0 0.0
        %279 = vmatprep.subr.mxu0 0.0
        %280 = vmatpush1.msra.mxu0 0.0
        %281 = vmatprep.subr.mxu0 0.0
        %282 = vmatpush1.msra.mxu0 0.0
        %283 = vmatprep.subr.mxu0 0.0
        %284 = vmatpush1.msra.mxu0 0.0
        %285 = vmatprep.subr.mxu0 0.0
        %286 = vmatpush1.msra.mxu0 0.0
        %287 = vmatprep.subr.mxu0 0.0
        %288 = vmatpush1.msra.mxu0 0.0
        %289 = vmatprep.subr.mxu0 0.0
        %290 = vmatpush1.msra.mxu0 0.0
        %291 = vmatprep.subr.mxu0 0.0
        %292 = vmatpush1.msra.mxu0 0.0
        %293 = vmatprep.subr.mxu0 0.0
        %294 = vmatpush1.msra.mxu0 0.0
        %295 = vmatprep.subr.mxu0 0.0
        %296 = vmatpush1.msra.mxu0 0.0
        %297 = vmatprep.subr.mxu0 0.0
        %298 = vmatpush1.msra.mxu0 0.0
        %299 = vmatprep.subr.mxu0 0.0
        %300 = vmatpush1.msra.mxu0 %v269
        %301 = vmatprep.subr.mxu0 0.0
        %302 = vmatpush1.msra.mxu0 %v245
        %303 = vmatprep.subr.mxu0 0.0
        %304 = vmatpush2.msra.mxu0 0.0
        %305 = vmatprep.subr.mxu0 0.0
        %306 = vmatpush2.msra.mxu0 0.0
        %307 = vmatprep.subr.mxu0 0.0
        %308 = vmatpush2.msra.mxu0 0.0
        %309 = vmatprep.subr.mxu0 0.0
        %310 = vmatpush2.msra.mxu0 0.0
        %311 = vmatprep.subr.mxu0 0.0
        %312 = vmatpush2.msra.mxu0 0.0
        %313 = vmatprep.subr.mxu0 0.0
        %314 = vmatpush2.msra.mxu0 0.0
        %315 = vmatprep.subr.mxu0 0.0
        %316 = vmatpush2.msra.mxu0 0.0
        %317 = vmatprep.subr.mxu0 0.0
        %318 = vmatpush2.msra.mxu0 0.0
        %319 = vmatprep.subr.mxu0 0.0
        %320 = vmatpush2.msra.mxu0 0.0
        %321 = vmatprep.subr.mxu0 0.0
        %322 = vmatpush2.msra.mxu0 0.0
        %323 = vmatprep.subr.mxu0 0.0
        %324 = vmatpush2.msra.mxu0 0.0
        %325 = vmatprep.subr.mxu0 0.0
        %326 = vmatpush2.msra.mxu0 0.0
        %327 = vmatprep.subr.mxu0 0.0
        %328 = vmatpush2.msra.mxu0 0.0
        %329 = vmatprep.subr.mxu0 0.0
        %330 = vmatpush2.msra.mxu0 0.0
        %331 = vmatprep.subr.mxu0 0.0
        %332 = vmatpush2.msra.mxu0 0.0
        %333 = vmatprep.subr.mxu0 0.0
        %334 = vmatpush2.msra.mxu0 0.0
        %335 = vmatprep.mubr.f32.mxu0 0.0
        %336 = vmatmul.mubr.f32.gmra.mxu0 %v256
        %v337 = vpop.f32.mrf.mxu0
        %v338 = vadd.f32 %v252, %v337
        %v339 = vpop.f32.mrf.mxu0
        %340 = vmatprep.mubr.f32.mxu0 0.0
        %341 = vmatmul.mubr.f32.gmra.mxu0 %v259
        %v342 = vpop.f32.mrf.mxu0
        %v343 = vadd.f32 %v252, %v342
        %v344 = vpop.f32.mrf.mxu0
        %345 = vmatprep.mubr.f32.mxu0 0.0
        %346 = vmatmul.mubr.f32.gmra.mxu0 %v262
        %v347 = vpop.f32.mrf.mxu0
        %v348 = vadd.f32 %v252, %v347
        %v349 = vpop.f32.mrf.mxu0
        %350 = vmatprep.mubr.f32.mxu0 0.0
        %351 = vmatmul.mubr.f32.gmra.mxu0 %v265
        %v352 = vpop.f32.mrf.mxu0
        %v353 = vadd.f32 %v252, %v352
        %v354 = vpop.f32.mrf.mxu0
        %355 = vdwg.mxu0
        %v356 = vmax.f32 %v338, 0.0
        %v357 = vmax.f32 %v343, 0.0
        %v358 = vmax.f32 %v348, 0.0
        %v359 = vmax.f32 %v353, 0.0
        %v360 = vld [vmem:[#allocation2] sm:$0xff]
        %v361 = vld [vmem:[#allocation2 + $0x8] sm:$0xff]
        %v362 = vld [vmem:[#allocation2 + $0x10] sm:$0xff]
        %v363 = vld [vmem:[#allocation2 + $0x18] sm:$0xff]
        %v364 = vld [vmem:[#allocation2 + $0x20] sm:$0xff]
        %v365 = vld [vmem:[#allocation2 + $0x28] sm:$0xff]
        %v366 = vld [vmem:[#allocation2 + $0x30] sm:$0xff]
        %v367 = vld [vmem:[#allocation2 + $0x38] sm:$0xff]
        %v368 = vld [vmem:[#allocation2 + $0x40] sm:$0xff]
        %v369 = vld [vmem:[#allocation2 + $0x48] sm:$0xff]
        %v370 = vld [vmem:[#allocation2 + $0x50] sm:$0xff]
        %v371 = vld [vmem:[#allocation2 + $0x58] sm:$0xff]
        %v372 = vld [vmem:[#allocation2 + $0x60] sm:$0xff]
        %v373 = vld [vmem:[#allocation2 + $0x68] sm:$0xff]
        %v374 = vld [vmem:[#allocation2 + $0x70] sm:$0xff]
        %v375 = vld [vmem:[#allocation2 + $0x78] sm:$0xff]
        %v376 = vld [vmem:[%s4] sm:$0x1]
        %v378 = vlaneseq
        %v379 = vshrl.u32 %v378, 7
        %v380 = vsub.s32 0, %v379
        %v381 = vrot.slane %v376, %v380
        %383 = vmatprep.subr.mxu0 0.0
        %384 = vmatpush1.msra.mxu0 %v375
        %385 = vmatprep.subr.mxu0 0.0
        %386 = vmatpush1.msra.mxu0 %v374
        %387 = vmatprep.subr.mxu0 0.0
        %388 = vmatpush1.msra.mxu0 %v373
        %389 = vmatprep.subr.mxu0 0.0
        %390 = vmatpush1.msra.mxu0 %v372
        %391 = vmatprep.subr.mxu0 0.0
        %392 = vmatpush1.msra.mxu0 %v371
        %393 = vmatprep.subr.mxu0 0.0
        %394 = vmatpush1.msra.mxu0 %v370
        %395 = vmatprep.subr.mxu0 0.0
        %396 = vmatpush1.msra.mxu0 %v369
        %397 = vmatprep.subr.mxu0 0.0
        %398 = vmatpush1.msra.mxu0 %v368
        %399 = vmatprep.subr.mxu0 0.0
        %400 = vmatpush1.msra.mxu0 %v367
        %401 = vmatprep.subr.mxu0 0.0
        %402 = vmatpush1.msra.mxu0 %v366
        %403 = vmatprep.subr.mxu0 0.0
        %404 = vmatpush1.msra.mxu0 %v365
        %405 = vmatprep.subr.mxu0 0.0
        %406 = vmatpush1.msra.mxu0 %v364
        %407 = vmatprep.subr.mxu0 0.0
        %408 = vmatpush1.msra.mxu0 %v363
        %409 = vmatprep.subr.mxu0 0.0
        %410 = vmatpush1.msra.mxu0 %v362
        %411 = vmatprep.subr.mxu0 0.0
        %412 = vmatpush1.msra.mxu0 %v361
        %413 = vmatprep.subr.mxu0 0.0
        %414 = vmatpush1.msra.mxu0 %v360
        %415 = vmatprep.subr.mxu0 0.0
        %416 = vmatpush2.msra.mxu0 0.0
        %417 = vmatprep.subr.mxu0 0.0
        %418 = vmatpush2.msra.mxu0 0.0
        %419 = vmatprep.subr.mxu0 0.0
        %420 = vmatpush2.msra.mxu0 0.0
        %421 = vmatprep.subr.mxu0 0.0
        %422 = vmatpush2.msra.mxu0 0.0
        %423 = vmatprep.subr.mxu0 0.0
        %424 = vmatpush2.msra.mxu0 0.0
        %425 = vmatprep.subr.mxu0 0.0
        %426 = vmatpush2.msra.mxu0 0.0
        %427 = vmatprep.subr.mxu0 0.0
        %428 = vmatpush2.msra.mxu0 0.0
        %429 = vmatprep.subr.mxu0 0.0
        %430 = vmatpush2.msra.mxu0 0.0
        %431 = vmatprep.subr.mxu0 0.0
        %432 = vmatpush2.msra.mxu0 0.0
        %433 = vmatprep.subr.mxu0 0.0
        %434 = vmatpush2.msra.mxu0 0.0
        %435 = vmatprep.subr.mxu0 0.0
        %436 = vmatpush2.msra.mxu0 0.0
        %437 = vmatprep.subr.mxu0 0.0
        %438 = vmatpush2.msra.mxu0 0.0
        %439 = vmatprep.subr.mxu0 0.0
        %440 = vmatpush2.msra.mxu0 0.0
        %441 = vmatprep.subr.mxu0 0.0
        %442 = vmatpush2.msra.mxu0 0.0
        %443 = vmatprep.subr.mxu0 0.0
        %444 = vmatpush2.msra.mxu0 0.0
        %445 = vmatprep.subr.mxu0 0.0
        %446 = vmatpush2.msra.mxu0 0.0
        %447 = vmatprep.mubr.f32.mxu0 0.0
        %448 = vmatmul.mubr.f32.gmra.mxu0 %v356
        %v449 = vpop.f32.mrf.mxu0
        %v450 = vadd.f32 %v381, %v449
        %v451 = vpop.f32.mrf.mxu0
        %452 = vmatprep.mubr.f32.mxu0 0.0
        %453 = vmatmul.mubr.f32.gmra.mxu0 %v357
        %v454 = vpop.f32.mrf.mxu0
        %v455 = vadd.f32 %v381, %v454
        %v456 = vpop.f32.mrf.mxu0
        %457 = vmatprep.mubr.f32.mxu0 0.0
        %458 = vmatmul.mubr.f32.gmra.mxu0 %v358
        %v459 = vpop.f32.mrf.mxu0
        %v460 = vadd.f32 %v381, %v459
        %v461 = vpop.f32.mrf.mxu0
        %462 = vmatprep.mubr.f32.mxu0 0.0
        %463 = vmatmul.mubr.f32.gmra.mxu0 %v359
        %v464 = vpop.f32.mrf.mxu0
        %v465 = vadd.f32 %v381, %v464
        %v466 = vpop.f32.mrf.mxu0
        %467 = vdwg.mxu0
        %468 = vst [vmem:[%s233] sm:$0xff] %v450
        %469 = vst [vmem:[%s233 + $0x8] sm:$0xff] %v455
        %470 = vst [vmem:[%s233 + $0x10] sm:$0xff] %v460
        %471 = vst [vmem:[%s233 + $0x18] sm:$0xff] %v465
        %s472 = sand.u32 %s138, 1
        %s473 = scalar_lea.sflag [#allocation4], %s472
        %s474 = sand.u32 %s138, 1
        %s475 = smul.addr %s474, 32
        %s476 = scalar_lea.vmem [#allocation5], %s475
        // Predicated region
        $region45: #{tpu_custom_call.1} parent=39 // pred_check
          %p477 = pneg %p148
        $region46: #{tpu_custom_call.1} parent=39 // pred_check_branch
          %479 = sbr.rel (%p477) target = $region48
        $region47: #{tpu_custom_call.1} parent=39 // pred_region
          %s480 = smul.u32 4, %s20
          %s482 = ssub.s32 512, 512
          %483 = vsyncadd %s473, %s482
          %s484 = smul.addr %s480, 128
          %s485 = scalar_lea.hbm %s5, %s484
          %s486 = sshll.u32 %s476, 4
          %s487 = int_to_ptr.vmem [resolvable:$true] %s486
          %492 = dma.vmem_to_hbm [thread:$0]  %s487, 512, %s485, %s473, 128, 128, 8
        $region48: #{tpu_custom_call.1} parent=39 // pred_fallthru
          _
      $region40: #{tpu_custom_call.1} parent=5 // pred_fallthru
        _
      %p493 = scmp.le.s32.totalorder 2, %s15
      // Predicated region
      $region49: #{tpu_custom_call.1} parent=5 // pred_check
        %p494 = pneg %p493
      $region50: #{tpu_custom_call.1} parent=5 // pred_check_branch
        %496 = sbr.rel (%p494) target = $region52
      $region51: #{tpu_custom_call.1} parent=5 // pred_region
        %s497 = ssub.s32 %s15, 2
        // Predicated region
        $region53: #{tpu_custom_call.1} parent=51 // pred_check
          %p498 = pneg %p154
        $region54: #{tpu_custom_call.1} parent=51 // pred_check_branch
          %500 = sbr.rel (%p498) target = $region56
        $region55: #{tpu_custom_call.1} parent=51 // pred_region
          %s501 = sand.u32 %s139, 1
          %s502 = scalar_lea.sflag [#allocation4], %s501
          %s503 = sand.u32 %s139, 1
          %s504 = smul.addr %s503, 32
          %s505 = scalar_lea.vmem [#allocation5], %s504
          %506 = dma.done %s502, 512
        $region56: #{tpu_custom_call.1} parent=51 // pred_fallthru
          _
      $region52: #{tpu_custom_call.1} parent=5 // pred_fallthru
        _
    $region6: #{tpu_custom_call.1} parent=1 // loop_footer
      %s19 = sadd.s32 1, %s15
    $region7: #{tpu_custom_call.1} parent=1 // loop_footer_branch
      %14 = sbr.rel target = $region3
    $region8: #{tpu_custom_call.1} parent=1 // loop_exit
      _
    %507 = vsyncpa [#allocation3], 1
    %s508 = scalar_lea.sflag [#allocation3], 1
    %509 = vsyncpa %s508, 1
    %510 = vsyncpa [#allocation4], 1
    %s511 = scalar_lea.sflag [#allocation4], 1
    %512 = vsyncpa %s511, 1

// kernel: tpu_custom_call.1
$region0: #{tpu_custom_call.1}
  #allocation0 [shape = 'u32[]', space=smem, size = 0x4, offset = 0x4, fixed_abs, tag = 'smem constant byte address 0x4 - core index']
  #allocation1 [shape = 'u32[144,128]{1,0:T(1,128)}', space=vmem, size = 0x12000, scoped, tag = 'internal scratch']
  %s0 = inlined_call_operand.vmem [shape: f32[64,12], index: 0, kind: input, shape index: {}]
  %s1 = inlined_call_operand.vmem [shape: f32[12,128], index: 1, kind: input, shape index: {}]
  %s2 = inlined_call_operand.vmem [shape: f32[1,128], index: 2, kind: input, shape index: {}]
  %s3 = inlined_call_operand.hbm [shape: f32[128,128], index: 3, kind: input, shape index: {}]
  %s4 = inlined_call_operand.vmem [shape: f32[1,128], index: 4, kind: input, shape index: {}]
  %s5 = inlined_call_operand.hbm [shape: f32[64,128], index: 5, kind: output, shape index: {}]
  %s6 = sld [smem:[#allocation0]]
  $region57: #{tpu_custom_call.1} parent=0
    _
  %s8 = ssub.s32 1, %s6
  %s9 = scalar_select 0, %s8, %s6
  $region1: #{tpu_custom_call.1} parent=0
    #allocation2 [shape = 'u8[65536]{0}', space=vmem, size = 0x10000, scoped, tag = 'input window, operand 3, single buffered']
    #allocation3 [shape = 's32[2]{0}', space=sflag, size = 0x8, scoped, tag = 'scoped memory for tpu_custom_call.1']
    #allocation4 [shape = 's32[2]{0}', space=sflag, size = 0x8, scoped, tag = 'scoped memory for tpu_custom_call.1']
    #allocation5 [shape = 'u8[32768]{0}', space=vmem, size = 0x8000, scoped, tag = 'output window, operand 0']
    %10 = vsyncpa [#allocation3], 0
    %11 = vsyncpa [#allocation4], 0
    %s12 = scalar_lea.sflag [#allocation4], 1
    %13 = vsyncpa %s12, 0
    loop: start=0, step=1, limit=4
    $region2: #{tpu_custom_call.1} parent=1 // loop_pre_header
      _
    $region3: #{tpu_custom_call.1} parent=1 // loop_header
      %s15 = sphi 0, %s19
      %p16 = scmp.ge.s32.totalorder %s15, 4
      %s25 = sphi 0, %s27
      %s28 = sphi 0, %s25
      %s29 = sphi 0, %s28
      %s45 = sphi 0, %s29
      %s49 = sphi 0, %s49
      %s51 = sphi 0, %s49
      %s52 = sphi 0, %s51
      %s66 = sphi 0, %s52
      %s70 = sphi 0, %s70
      %s72 = sphi 0, %s70
      %s73 = sphi 0, %s72
      %s87 = sphi 0, %s73
      %s91 = sphi 0, %s91
      %s93 = sphi 0, %s91
      %s94 = sphi 0, %s93
      %s108 = sphi 0, %s94
      %s112 = sphi 0, %s112
      %s114 = sphi 0, %s112
      %s115 = sphi 0, %s114
      %s129 = sphi 0, %s115
      %s135 = sphi 0, %s137
      %s138 = sphi 0, %s135
      %s139 = sphi 0, %s138
      %s155 = sphi 0, %s139
    $region4: #{tpu_custom_call.1} parent=1 // loop_header_branch
      %18 = sbr.rel (%p16) target = $region8
    $region5: #{tpu_custom_call.1} parent=1 // loop_body
      %s20 = ssub.s32 %s15, 1
      %s21 = ssub.s32 %s15, 2
      %s22 = sadd.s32 %s15, 1
      %s23 = ssub.s32 %s15, %s22
      %p24 = scmp.eq.s32.totalorder %s23, 0
      %s26 = sadd.s32 %s25, 1
      %s27 = scalar_select %p24, %s25, %s26
      %p30 = pneg %p24
      %p31 = scmp.eq.s32.totalorder %s15, 1
      %p32 = por %p30, %p31
      %p33 = scmp.ne.s32.totalorder %s25, %s28
      %p34 = scmp.eq.s32.totalorder %s15, 0
      %p35 = por %p33, %p34
      %p36 = scmp.ne.s32.totalorder %s25, %s28
      %p37 = scmp.eq.s32.totalorder %s20, 1
      %p38 = por %p36, %p37
      %p39 = scmp.ne.s32.totalorder %s28, %s29
      %p40 = scmp.eq.s32.totalorder %s20, 0
      %p41 = por %p39, %p40
      %p42 = scmp.ne.s32.totalorder %s28, %s29
      %p43 = scmp.eq.s32.totalorder %s21, 1
      %p44 = por %p42, %p43
      %p46 = scmp.ne.s32.totalorder %s29, %s45
      %p47 = scmp.eq.s32.totalorder %s21, 0
      %p48 = por %p46, %p47
      %s50 = sadd.s32 %s49, 1
      %p53 = scmp.eq.s32.totalorder %s15, 1
      %p54 = scmp.ne.s32.totalorder %s49, %s51
      %p55 = scmp.eq.s32.totalorder %s15, 0
      %p56 = por %p54, %p55
      %p57 = scmp.ne.s32.totalorder %s49, %s51
      %p58 = scmp.eq.s32.totalorder %s20, 1
      %p59 = por %p57, %p58
      %p60 = scmp.ne.s32.totalorder %s51, %s52
      %p61 = scmp.eq.s32.totalorder %s20, 0
      %p62 = por %p60, %p61
      %p63 = scmp.ne.s32.totalorder %s51, %s52
      %p64 = scmp.eq.s32.totalorder %s21, 1
      %p65 = por %p63, %p64
      %p67 = scmp.ne.s32.totalorder %s52, %s66
      %p68 = scmp.eq.s32.totalorder %s21, 0
      %p69 = por %p67, %p68
      %s71 = sadd.s32 %s70, 1
      %p74 = scmp.eq.s32.totalorder %s15, 1
      %p75 = scmp.ne.s32.totalorder %s70, %s72
      %p76 = scmp.eq.s32.totalorder %s15, 0
      %p77 = por %p75, %p76
      %p78 = scmp.ne.s32.totalorder %s70, %s72
      %p79 = scmp.eq.s32.totalorder %s20, 1
      %p80 = por %p78, %p79
      %p81 = scmp.ne.s32.totalorder %s72, %s73
      %p82 = scmp.eq.s32.totalorder %s20, 0
      %p83 = por %p81, %p82
      %p84 = scmp.ne.s32.totalorder %s72, %s73
      %p85 = scmp.eq.s32.totalorder %s21, 1
      %p86 = por %p84, %p85
      %p88 = scmp.ne.s32.totalorder %s73, %s87
      %p89 = scmp.eq.s32.totalorder %s21, 0
      %p90 = por %p88, %p89
      %s92 = sadd.s32 %s91, 1
      %p95 = scmp.eq.s32.totalorder %s15, 1
      %p96 = scmp.ne.s32.totalorder %s91, %s93
      %p97 = scmp.eq.s32.totalorder %s15, 0
      %p98 = por %p96, %p97
      %p99 = scmp.ne.s32.totalorder %s91, %s93
      %p100 = scmp.eq.s32.totalorder %s20, 1
      %p101 = por %p99, %p100
      %p102 = scmp.ne.s32.totalorder %s93, %s94
      %p103 = scmp.eq.s32.totalorder %s20, 0
      %p104 = por %p102, %p103
      %p105 = scmp.ne.s32.totalorder %s93, %s94
      %p106 = scmp.eq.s32.totalorder %s21, 1
      %p107 = por %p105, %p106
      %p109 = scmp.ne.s32.totalorder %s94, %s108
      %p110 = scmp.eq.s32.totalorder %s21, 0
      %p111 = por %p109, %p110
      %s113 = sadd.s32 %s112, 1
      %p116 = scmp.eq.s32.totalorder %s15, 1
      %p117 = scmp.ne.s32.totalorder %s112, %s114
      %p118 = scmp.eq.s32.totalorder %s15, 0
      %p119 = por %p117, %p118
      %p120 = scmp.ne.s32.totalorder %s112, %s114
      %p121 = scmp.eq.s32.totalorder %s20, 1
      %p122 = por %p120, %p121
      %p123 = scmp.ne.s32.totalorder %s114, %s115
      %p124 = scmp.eq.s32.totalorder %s20, 0
      %p125 = por %p123, %p124
      %p126 = scmp.ne.s32.totalorder %s114, %s115
      %p127 = scmp.eq.s32.totalorder %s21, 1
      %p128 = por %p126, %p127
      %p130 = scmp.ne.s32.totalorder %s115, %s129
      %p131 = scmp.eq.s32.totalorder %s21, 0
      %p132 = por %p130, %p131
      %s133 = ssub.s32 %s15, %s22
      %p134 = scmp.eq.s32.totalorder %s133, 0
      %s136 = sadd.s32 %s135, 1
      %s137 = scalar_select %p134, %s135, %s136
      %p140 = pneg %p134
      %p141 = scmp.eq.s32.totalorder %s15, 1
      %p142 = por %p140, %p141
      %p143 = scmp.ne.s32.totalorder %s135, %s138
      %p144 = scmp.eq.s32.totalorder %s15, 0
      %p145 = por %p143, %p144
      %p146 = scmp.ne.s32.totalorder %s135, %s138
      %p147 = scmp.eq.s32.totalorder %s20, 1
      %p148 = por %p146, %p147
      %p149 = scmp.ne.s32.totalorder %s138, %s139
      %p150 = scmp.eq.s32.totalorder %s20, 0
      %p151 = por %p149, %p150
      %p152 = scmp.ne.s32.totalorder %s138, %s139
      %p153 = scmp.eq.s32.totalorder %s21, 1
      %p154 = por %p152, %p153
      %p156 = scmp.ne.s32.totalorder %s139, %s155
      %p157 = scmp.eq.s32.totalorder %s21, 0
      %p158 = por %p156, %p157
      %p159 = scmp.le.s32.totalorder 1, %s15
      %p160 = scmp.lt.s32.totalorder %s15, 3
      %p161 = pnand %p159, %p160
      %p162 = pneg %p161
      // Predicated region
      $region9: #{tpu_custom_call.1} parent=5 // pred_check
        _
      $region10: #{tpu_custom_call.1} parent=5 // pred_check_branch
        %164 = sbr.rel (%p161) target = $region12
      $region11: #{tpu_custom_call.1} parent=5 // pred_region
        %s165 = ssub.s32 %s15, 1
        // Predicated region
        $region13: #{tpu_custom_call.1} parent=11 // pred_check
          %p166 = pneg %p62
        $region14: #{tpu_custom_call.1} parent=11 // pred_check_branch
          %168 = sbr.rel (%p166) target = $region16
        $region15: #{tpu_custom_call.1} parent=11 // pred_region
          _
        $region16: #{tpu_custom_call.1} parent=11 // pred_fallthru
          _
        // Predicated region
        $region17: #{tpu_custom_call.1} parent=11 // pred_check
          %p169 = pneg %p83
        $region18: #{tpu_custom_call.1} parent=11 // pred_check_branch
          %171 = sbr.rel (%p169) target = $region20
        $region19: #{tpu_custom_call.1} parent=11 // pred_region
          _
        $region20: #{tpu_custom_call.1} parent=11 // pred_fallthru
          _
        // Predicated region
        $region21: #{tpu_custom_call.1} parent=11 // pred_check
          %p172 = pneg %p104
        $region22: #{tpu_custom_call.1} parent=11 // pred_check_branch
          %174 = sbr.rel (%p172) target = $region24
        $region23: #{tpu_custom_call.1} parent=11 // pred_region
          %s176 = ssub.s32 2048, 2048
          %177 = vsyncadd [#allocation3], %s176
          %s178 = sshll.u32 [#allocation2], 4
          %s179 = int_to_ptr.vmem [resolvable:$true] %s178
          %184 = dma.hbm_to_vmem [thread:$0]  %s3, 2048, %s179, [#allocation3], 128, 128, 8
        $region24: #{tpu_custom_call.1} parent=11 // pred_fallthru
          _
        // Predicated region
        $region25: #{tpu_custom_call.1} parent=11 // pred_check
          %p185 = pneg %p125
        $region26: #{tpu_custom_call.1} parent=11 // pred_check_branch
          %187 = sbr.rel (%p185) target = $region28
        $region27: #{tpu_custom_call.1} parent=11 // pred_region
          _
        $region28: #{tpu_custom_call.1} parent=11 // pred_fallthru
          _
      $region12: #{tpu_custom_call.1} parent=5 // pred_fallthru
        _
      %p188 = scmp.lt.s32.totalorder %s15, 2
      // Predicated region
      $region29: #{tpu_custom_call.1} parent=5 // pred_check
        %p189 = pneg %p188
      $region30: #{tpu_custom_call.1} parent=5 // pred_check_branch
        %191 = sbr.rel (%p189) target = $region32
      $region31: #{tpu_custom_call.1} parent=5 // pred_region
        // Predicated region
        $region33: #{tpu_custom_call.1} parent=31 // pred_check
          %p192 = pneg %p35
        $region34: #{tpu_custom_call.1} parent=31 // pred_check_branch
          %194 = sbr.rel (%p192) target = $region36
        $region35: #{tpu_custom_call.1} parent=31 // pred_region
          %s195 = smul.u32 4, %s15
          %p196 = scmp.lt.s32.totalorder %s195, 7
          %s197 = scalar_select %p196, %s195, 7
          %s198 = smul.addr %s197, 8
          %s199 = scalar_lea.vmem %s0, %s198
          %s200 = smul.u32 4, %s15
        $region36: #{tpu_custom_call.1} parent=31 // pred_fallthru
          _
      $region32: #{tpu_custom_call.1} parent=5 // pred_fallthru
        _
      %p201 = scmp.le.s32.totalorder 1, %s15
      %p202 = scmp.lt.s32.totalorder %s15, 3
      %p203 = pnand %p201, %p202
      %p204 = pneg %p203
      // Predicated region
      $region37: #{tpu_custom_call.1} parent=5 // pred_check
        _
      $region38: #{tpu_custom_call.1} parent=5 // pred_check_branch
        %206 = sbr.rel (%p203) target = $region40
      $region39: #{tpu_custom_call.1} parent=5 // pred_region
        %s207 = ssub.s32 %s15, 1
        // Predicated region
        $region41: #{tpu_custom_call.1} parent=39 // pred_check
          %p208 = pneg %p104
        $region42: #{tpu_custom_call.1} parent=39 // pred_check_branch
          %210 = sbr.rel (%p208) target = $region44
        $region43: #{tpu_custom_call.1} parent=39 // pred_region
          %211 = dma.done [#allocation3], 2048
        $region44: #{tpu_custom_call.1} parent=39 // pred_fallthru
          _
        %s212 = smul.u32 4, %s20
        %p213 = scmp.lt.s32.totalorder %s212, 7
        %s214 = scalar_select %p213, %s212, 7
        %s215 = smul.addr %s214, 8
        %s216 = scalar_lea.vmem %s0, %s215
        %p217 = pneg %p41
        %p218 = pneg %p38
        %p219 = pneg %p62
        %p220 = pneg %p59
        %p221 = pneg %p83
        %p222 = pneg %p80
        %p223 = pneg %p104
        %p224 = pneg %p101
        %p225 = pneg %p125
        %p226 = pneg %p122
        %p227 = pneg %p151
        %p228 = pneg %p148
        %s229 = sand.u32 %s138, 1
        %s230 = scalar_lea.sflag [#allocation4], %s229
        %s231 = sand.u32 %s138, 1
        %s232 = smul.addr %s231, 32
        %s233 = scalar_lea.vmem [#allocation5], %s232
        %s234 = smul.u32 4, %s20
        %p235 = scmp.lt.s32.totalorder %s234, 7
        %s236 = scalar_select %p235, %s234, 7
        %s237 = smul.addr %s236, 8
        %s238 = scalar_lea.vmem %s0, %s237
        %s239 = smul.u32 4, %s20
        %s240 = smul.u32 4, %s20
        %v241 = vld [vmem:[%s238] sm:$0xff]
        %v242 = vld [vmem:[%s238 + $0x8] sm:$0xff]
        %v243 = vld [vmem:[%s238 + $0x10] sm:$0xff]
        %v244 = vld [vmem:[%s238 + $0x18] sm:$0xff]
        %v245 = vld [vmem:[%s1] sm:$0xff]
        %v246 = vld [vmem:[%s1 + $0x8] sm:$0xf]
        %v247 = vld [vmem:[%s2] sm:$0x1]
        %v249 = vlaneseq
        %v250 = vshrl.u32 %v249, 7
        %v251 = vsub.s32 0, %v250
        %v252 = vrot.slane %v247, %v251
        %vm254 = vcmask 97280
        %v256 = vsel %vm254, %v241, 0
        %v259 = vsel %vm254, %v242, 0
        %v262 = vsel %vm254, %v243, 0
        %v265 = vsel %vm254, %v244, 0
        %vm267 = vcmask 1043456
        %v269 = vsel %vm267, %v246, 0
        %271 = vmatprep.subr.mxu0 0.0
        %272 = vmatpush1.msra.mxu0 0.0
        %273 = vmatprep.subr.mxu0 0.0
        %274 = vmatpush1.msra.mxu0 0.0
        %275 = vmatprep.subr.mxu0 0.0
        %276 = vmatpush1.msra.mxu0 0.0
        %277 = vmatprep.subr.mxu0 0.0
        %278 = vmatpush1.msra.mxu0 0.0
        %279 = vmatprep.subr.mxu0 0.0
        %280 = vmatpush1.msra.mxu0 0.0
        %281 = vmatprep.subr.mxu0 0.0
        %282 = vmatpush1.msra.mxu0 0.0
        %283 = vmatprep.subr.mxu0 0.0
        %284 = vmatpush1.msra.mxu0 0.0
        %285 = vmatprep.subr.mxu0 0.0
        %286 = vmatpush1.msra.mxu0 0.0
        %287 = vmatprep.subr.mxu0 0.0
        %288 = vmatpush1.msra.mxu0 0.0
        %289 = vmatprep.subr.mxu0 0.0
        %290 = vmatpush1.msra.mxu0 0.0
        %291 = vmatprep.subr.mxu0 0.0
        %292 = vmatpush1.msra.mxu0 0.0
        %293 = vmatprep.subr.mxu0 0.0
        %294 = vmatpush1.msra.mxu0 0.0
        %295 = vmatprep.subr.mxu0 0.0
        %296 = vmatpush1.msra.mxu0 0.0
        %297 = vmatprep.subr.mxu0 0.0
        %298 = vmatpush1.msra.mxu0 0.0
        %299 = vmatprep.subr.mxu0 0.0
        %300 = vmatpush1.msra.mxu0 %v269
        %301 = vmatprep.subr.mxu0 0.0
        %302 = vmatpush1.msra.mxu0 %v245
        %303 = vmatprep.subr.mxu0 0.0
        %304 = vmatpush2.msra.mxu0 0.0
        %305 = vmatprep.subr.mxu0 0.0
        %306 = vmatpush2.msra.mxu0 0.0
        %307 = vmatprep.subr.mxu0 0.0
        %308 = vmatpush2.msra.mxu0 0.0
        %309 = vmatprep.subr.mxu0 0.0
        %310 = vmatpush2.msra.mxu0 0.0
        %311 = vmatprep.subr.mxu0 0.0
        %312 = vmatpush2.msra.mxu0 0.0
        %313 = vmatprep.subr.mxu0 0.0
        %314 = vmatpush2.msra.mxu0 0.0
        %315 = vmatprep.subr.mxu0 0.0
        %316 = vmatpush2.msra.mxu0 0.0
        %317 = vmatprep.subr.mxu0 0.0
        %318 = vmatpush2.msra.mxu0 0.0
        %319 = vmatprep.subr.mxu0 0.0
        %320 = vmatpush2.msra.mxu0 0.0
        %321 = vmatprep.subr.mxu0 0.0
        %322 = vmatpush2.msra.mxu0 0.0
        %323 = vmatprep.subr.mxu0 0.0
        %324 = vmatpush2.msra.mxu0 0.0
        %325 = vmatprep.subr.mxu0 0.0
        %326 = vmatpush2.msra.mxu0 0.0
        %327 = vmatprep.subr.mxu0 0.0
        %328 = vmatpush2.msra.mxu0 0.0
        %329 = vmatprep.subr.mxu0 0.0
        %330 = vmatpush2.msra.mxu0 0.0
        %331 = vmatprep.subr.mxu0 0.0
        %332 = vmatpush2.msra.mxu0 0.0
        %333 = vmatprep.subr.mxu0 0.0
        %334 = vmatpush2.msra.mxu0 0.0
        %335 = vmatprep.mubr.f32.mxu0 0.0
        %336 = vmatmul.mubr.f32.gmra.mxu0 %v256
        %v337 = vpop.f32.mrf.mxu0
        %v338 = vadd.f32 %v252, %v337
        %v339 = vpop.f32.mrf.mxu0
        %340 = vmatprep.mubr.f32.mxu0 0.0
        %341 = vmatmul.mubr.f32.gmra.mxu0 %v259
        %v342 = vpop.f32.mrf.mxu0
        %v343 = vadd.f32 %v252, %v342
        %v344 = vpop.f32.mrf.mxu0
        %345 = vmatprep.mubr.f32.mxu0 0.0
        %346 = vmatmul.mubr.f32.gmra.mxu0 %v262
        %v347 = vpop.f32.mrf.mxu0
        %v348 = vadd.f32 %v252, %v347
        %v349 = vpop.f32.mrf.mxu0
        %350 = vmatprep.mubr.f32.mxu0 0.0
        %351 = vmatmul.mubr.f32.gmra.mxu0 %v265
        %v352 = vpop.f32.mrf.mxu0
        %v353 = vadd.f32 %v252, %v352
        %v354 = vpop.f32.mrf.mxu0
        %355 = vdwg.mxu0
        %v356 = vmax.f32 %v338, 0.0
        %v357 = vmax.f32 %v343, 0.0
        %v358 = vmax.f32 %v348, 0.0
        %v359 = vmax.f32 %v353, 0.0
        %v360 = vld [vmem:[#allocation2] sm:$0xff]
        %v361 = vld [vmem:[#allocation2 + $0x8] sm:$0xff]
        %v362 = vld [vmem:[#allocation2 + $0x10] sm:$0xff]
        %v363 = vld [vmem:[#allocation2 + $0x18] sm:$0xff]
        %v364 = vld [vmem:[#allocation2 + $0x20] sm:$0xff]
        %v365 = vld [vmem:[#allocation2 + $0x28] sm:$0xff]
        %v366 = vld [vmem:[#allocation2 + $0x30] sm:$0xff]
        %v367 = vld [vmem:[#allocation2 + $0x38] sm:$0xff]
        %v368 = vld [vmem:[#allocation2 + $0x40] sm:$0xff]
        %v369 = vld [vmem:[#allocation2 + $0x48] sm:$0xff]
        %v370 = vld [vmem:[#allocation2 + $0x50] sm:$0xff]
        %v371 = vld [vmem:[#allocation2 + $0x58] sm:$0xff]
        %v372 = vld [vmem:[#allocation2 + $0x60] sm:$0xff]
        %v373 = vld [vmem:[#allocation2 + $0x68] sm:$0xff]
        %v374 = vld [vmem:[#allocation2 + $0x70] sm:$0xff]
        %v375 = vld [vmem:[#allocation2 + $0x78] sm:$0xff]
        %v376 = vld [vmem:[%s4] sm:$0x1]
        %v378 = vlaneseq
        %v379 = vshrl.u32 %v378, 7
        %v380 = vsub.s32 0, %v379
        %v381 = vrot.slane %v376, %v380
        %383 = vmatprep.subr.mxu0 0.0
        %384 = vmatpush1.msra.mxu0 %v375
        %385 = vmatprep.subr.mxu0 0.0
        %386 = vmatpush1.msra.mxu0 %v374
        %387 = vmatprep.subr.mxu0 0.0
        %388 = vmatpush1.msra.mxu0 %v373
        %389 = vmatprep.subr.mxu0 0.0
        %390 = vmatpush1.msra.mxu0 %v372
        %391 = vmatprep.subr.mxu0 0.0
        %392 = vmatpush1.msra.mxu0 %v371
        %393 = vmatprep.subr.mxu0 0.0
        %394 = vmatpush1.msra.mxu0 %v370
        %395 = vmatprep.subr.mxu0 0.0
        %396 = vmatpush1.msra.mxu0 %v369
        %397 = vmatprep.subr.mxu0 0.0
        %398 = vmatpush1.msra.mxu0 %v368
        %399 = vmatprep.subr.mxu0 0.0
        %400 = vmatpush1.msra.mxu0 %v367
        %401 = vmatprep.subr.mxu0 0.0
        %402 = vmatpush1.msra.mxu0 %v366
        %403 = vmatprep.subr.mxu0 0.0
        %404 = vmatpush1.msra.mxu0 %v365
        %405 = vmatprep.subr.mxu0 0.0
        %406 = vmatpush1.msra.mxu0 %v364
        %407 = vmatprep.subr.mxu0 0.0
        %408 = vmatpush1.msra.mxu0 %v363
        %409 = vmatprep.subr.mxu0 0.0
        %410 = vmatpush1.msra.mxu0 %v362
        %411 = vmatprep.subr.mxu0 0.0
        %412 = vmatpush1.msra.mxu0 %v361
        %413 = vmatprep.subr.mxu0 0.0
        %414 = vmatpush1.msra.mxu0 %v360
        %415 = vmatprep.subr.mxu0 0.0
        %416 = vmatpush2.msra.mxu0 0.0
        %417 = vmatprep.subr.mxu0 0.0
        %418 = vmatpush2.msra.mxu0 0.0
        %419 = vmatprep.subr.mxu0 0.0
        %420 = vmatpush2.msra.mxu0 0.0
        %421 = vmatprep.subr.mxu0 0.0
        %422 = vmatpush2.msra.mxu0 0.0
        %423 = vmatprep.subr.mxu0 0.0
        %424 = vmatpush2.msra.mxu0 0.0
        %425 = vmatprep.subr.mxu0 0.0
        %426 = vmatpush2.msra.mxu0 0.0
        %427 = vmatprep.subr.mxu0 0.0
        %428 = vmatpush2.msra.mxu0 0.0
        %429 = vmatprep.subr.mxu0 0.0
        %430 = vmatpush2.msra.mxu0 0.0
        %431 = vmatprep.subr.mxu0 0.0
        %432 = vmatpush2.msra.mxu0 0.0
        %433 = vmatprep.subr.mxu0 0.0
        %434 = vmatpush2.msra.mxu0 0.0
        %435 = vmatprep.subr.mxu0 0.0
        %436 = vmatpush2.msra.mxu0 0.0
        %437 = vmatprep.subr.mxu0 0.0
        %438 = vmatpush2.msra.mxu0 0.0
        %439 = vmatprep.subr.mxu0 0.0
        %440 = vmatpush2.msra.mxu0 0.0
        %441 = vmatprep.subr.mxu0 0.0
        %442 = vmatpush2.msra.mxu0 0.0
        %443 = vmatprep.subr.mxu0 0.0
        %444 = vmatpush2.msra.mxu0 0.0
        %445 = vmatprep.subr.mxu0 0.0
        %446 = vmatpush2.msra.mxu0 0.0
        %447 = vmatprep.mubr.f32.mxu0 0.0
        %448 = vmatmul.mubr.f32.gmra.mxu0 %v356
        %v449 = vpop.f32.mrf.mxu0
        %v450 = vadd.f32 %v381, %v449
        %v451 = vpop.f32.mrf.mxu0
        %452 = vmatprep.mubr.f32.mxu0 0.0
        %453 = vmatmul.mubr.f32.gmra.mxu0 %v357
        %v454 = vpop.f32.mrf.mxu0
        %v455 = vadd.f32 %v381, %v454
        %v456 = vpop.f32.mrf.mxu0
        %457 = vmatprep.mubr.f32.mxu0 0.0
        %458 = vmatmul.mubr.f32.gmra.mxu0 %v358
        %v459 = vpop.f32.mrf.mxu0
        %v460 = vadd.f32 %v381, %v459
        %v461 = vpop.f32.mrf.mxu0
        %462 = vmatprep.mubr.f32.mxu0 0.0
        %463 = vmatmul.mubr.f32.gmra.mxu0 %v359
        %v464 = vpop.f32.mrf.mxu0
        %v465 = vadd.f32 %v381, %v464
        %v466 = vpop.f32.mrf.mxu0
        %467 = vdwg.mxu0
        %468 = vst [vmem:[%s233] sm:$0xff] %v450
        %469 = vst [vmem:[%s233 + $0x8] sm:$0xff] %v455
        %470 = vst [vmem:[%s233 + $0x10] sm:$0xff] %v460
        %471 = vst [vmem:[%s233 + $0x18] sm:$0xff] %v465
        %s472 = sand.u32 %s138, 1
        %s473 = scalar_lea.sflag [#allocation4], %s472
        %s474 = sand.u32 %s138, 1
        %s475 = smul.addr %s474, 32
        %s476 = scalar_lea.vmem [#allocation5], %s475
        // Predicated region
        $region45: #{tpu_custom_call.1} parent=39 // pred_check
          %p477 = pneg %p148
        $region46: #{tpu_custom_call.1} parent=39 // pred_check_branch
          %479 = sbr.rel (%p477) target = $region48
        $region47: #{tpu_custom_call.1} parent=39 // pred_region
          %s480 = smul.u32 4, %s20
          %s482 = ssub.s32 512, 512
          %483 = vsyncadd %s473, %s482
          %s484 = smul.addr %s480, 128
          %s485 = scalar_lea.hbm %s5, %s484
          %s486 = sshll.u32 %s476, 4
          %s487 = int_to_ptr.vmem [resolvable:$true] %s486
          %492 = dma.vmem_to_hbm [thread:$0]  %s487, 512, %s485, %s473, 128, 128, 8
        $region48: #{tpu_custom_call.1} parent=39 // pred_fallthru
          _
      $region40: #{tpu_custom_call.1} parent=5 // pred_fallthru
        _
      %p493 = scmp.le.s32.totalorder 2, %s15
      // Predicated region
      $region49: #{tpu_custom_call.1} parent=5 // pred_check
        %p494 = pneg %p493
      $region50: #{tpu_custom_call.1} parent=5 // pred_check_branch
        %496 = sbr.rel (%p494) target = $region52
      $region51: #{tpu_custom_call.1} parent=5 // pred_region
        %s497 = ssub.s32 %s15, 2
        // Predicated region
        $region53: #{tpu_custom_call.1} parent=51 // pred_check
          %p498 = pneg %p154
        $region54: #{tpu_custom_call.1} parent=51 // pred_check_branch
          %500 = sbr.rel (%p498) target = $region56
        $region55: #{tpu_custom_call.1} parent=51 // pred_region
          %s501 = sand.u32 %s139, 1
          %s502 = scalar_lea.sflag [#allocation4], %s501
          %s503 = sand.u32 %s139, 1
          %s504 = smul.addr %s503, 32
          %s505 = scalar_lea.vmem [#allocation5], %s504
          %506 = dma.done %s502, 512
        $region56: #{tpu_custom_call.1} parent=51 // pred_fallthru
          _
      $region52: #{tpu_custom_call.1} parent=5 // pred_fallthru
        _
    $region6: #{tpu_custom_call.1} parent=1 // loop_footer
      %s19 = sadd.s32 1, %s15
    $region7: #{tpu_custom_call.1} parent=1 // loop_footer_branch
      %14 = sbr.rel target = $region3
    $region8: #{tpu_custom_call.1} parent=1 // loop_exit
      _
    %507 = vsyncpa [#allocation3], 1
    %s508 = scalar_lea.sflag [#allocation3], 1
    %509 = vsyncpa %s508, 1
    %510 = vsyncpa [#allocation4], 1
    %s511 = scalar_lea.sflag [#allocation4], 1
    %512 = vsyncpa %s511, 1

</llo_original>
